<compile_context>
chip_gen: v5e
topology: v5e:2x2
jax: 0.10.0
libtpu: 0.0.40
codegen_flags: <defaults>
</compile_context>

<pallas_src>
import functools

import jax
import jax.numpy as jnp
from jax.experimental import pallas as pl
from jax.experimental.pallas import tpu as pltpu


def _round_up(x, m):
    return (x + m - 1) // m * m


def _detect_vmem_capacity():
    try:
        return int(pltpu.get_tpu_info().vmem_capacity_bytes)
    except Exception:
        return 64 * 1024 * 1024          # conservative (v7x per-TensorCore)


_VMEM_CAPACITY = _detect_vmem_capacity()
# Hard limit handed to Mosaic; planning budget leaves extra headroom for the
# compiler's internal scratch (intermediate h, bf16 copies, spill slack).
_VMEM_LIMIT = min(int(_VMEM_CAPACITY * 0.85), 110 * 1024 * 1024)
_VMEM_BUDGET = int(_VMEM_LIMIT * 0.80)


# ---------------------------------------------------------------------------
# Kernels
# ---------------------------------------------------------------------------
def _ffn_kernel_resident(x_ref, w1_ref, b1_ref, w2_ref, b2_ref, o_ref):
    # x_ref : (tm, idim_p)      input dtype (cast to bf16 in-kernel)
    # w1_ref: (idim_p, hid_p)   bf16, VMEM-resident across the whole grid
    # b1_ref: (1, hid_p)        f32
    # w2_ref: (hid_p, idim_p)   bf16, VMEM-resident
    # b2_ref: (1, idim_p)       f32
    # o_ref : (tm, idim_p)
    x_bf = x_ref[...].astype(jnp.bfloat16)
    h = jnp.dot(x_bf, w1_ref[...], preferred_element_type=jnp.float32)
    h = jnp.maximum(h + b1_ref[...], 0.0)            # bias + ReLU in f32
    # dropout: identity in eval / inference mode.
    y = jnp.dot(h.astype(jnp.bfloat16), w2_ref[...],
                preferred_element_type=jnp.float32)
    o_ref[...] = (y + b2_ref[...]).astype(o_ref.dtype)


def _ffn_kernel_chunked(x_ref, w1_ref, b1_ref, w2_ref, b2_ref, o_ref, acc_ref):
    # Hidden dim streamed in th-sized chunks; k is the inner reduction axis.
    k = pl.program_id(1)

    @pl.when(k == 0)
    def _():
        acc_ref[...] = jnp.zeros_like(acc_ref)

    x_bf = x_ref[...].astype(jnp.bfloat16)
    h = jnp.dot(x_bf, w1_ref[...], preferred_element_type=jnp.float32)
    h = jnp.maximum(h + b1_ref[...], 0.0)
    acc_ref[...] += jnp.dot(h.astype(jnp.bfloat16), w2_ref[...],
                            preferred_element_type=jnp.float32)

    @pl.when(k == pl.num_programs(1) - 1)
    def _():
        o_ref[...] = (acc_ref[...] + b2_ref[...]).astype(o_ref.dtype)


# ---------------------------------------------------------------------------
# Wrapper
# ---------------------------------------------------------------------------
@functools.partial(jax.jit, static_argnames=("tm",))
def positionwise_feed_forward(x, w1, b1, w2, b2, *, tm=256):
    """x: (batch, seq, idim). w1: (idim, hidden), w2: (hidden, idim) (pre-transposed)."""
    batch, seq, idim = x.shape
    idim_w, hidden = w1.shape
    assert idim_w == idim and w2.shape == (hidden, idim)
    assert b1.shape == (hidden,) and b2.shape == (idim,)

    M = batch * seq
    idim_p = _round_up(idim, 128)                 # lane-dense feature dim
    hid_full = _round_up(hidden, 128)

    x_bytes = jnp.dtype(x.dtype).itemsize
    out_bytes = x_bytes

    # Row tile: multiple of 16 (bf16 sublane packing), clamped to M.
    tm = max(16, min(int(tm), _round_up(M, 16)))
    tm = _round_up(tm, 16)

    # ---- VMEM footprint models (pipelined blocks are double-buffered) ------
    def resident_fp(tm_, hp_):
        fp = 2 * tm_ * idim_p * (x_bytes + out_bytes)     # x + out tiles
        fp += 2 * 2 * idim_p * hp_ * 2                    # W1 + W2 bf16
        fp += 2 * 8 * (hp_ + idim_p) * 4                  # biases (sublane pad)
        fp += tm_ * idim_p * 2 + tm_ * hp_ * (4 + 2)      # internal: x_bf, h, h_bf
        return fp

    def chunked_fp(tm_, th_):
        fp = 2 * tm_ * idim_p * (x_bytes + out_bytes)
        fp += tm_ * idim_p * 4                            # f32 accumulator
        fp += 2 * 2 * idim_p * th_ * 2                    # W1/W2 chunks bf16
        fp += 2 * 8 * (th_ + idim_p) * 4
        fp += tm_ * idim_p * 2 + tm_ * th_ * (4 + 2)
        return fp

    resident = resident_fp(tm, hid_full) <= _VMEM_BUDGET
    if resident:
        th = hidden_p = hid_full
    else:
        # TODO(synk): on v7x a further idim-output split (extra grid axis)
        # would let tm grow under 64 MiB; chunked-hidden is the safe fallback.
        th = min(_round_up(min(hidden, 2048), 256), hid_full)
        while th > 256 and chunked_fp(tm, th) > _VMEM_BUDGET:
            th -= 256
        while tm > 32 and chunked_fp(tm, th) > _VMEM_BUDGET:
            tm = _round_up(max(32, tm // 2), 16)
        hidden_p = _round_up(hidden, th)

    # Prefer a row tile that divides M (skips the row-axis pad copy) as long
    # as it stays >= tm/2 so per-step overhead remains amortized.
    if M % tm != 0:
        for cand in range(tm, max(16, tm // 2) - 1, -16):
            if cand >= 16 and M % cand == 0:
                tm = cand
                break
    M_p = _round_up(M, tm)

    # ---- zero-pad (numerically exact), skipping no-op pads -----------------
    x2d = x.reshape(M, idim)
    if M_p != M or idim_p != idim:
        x2d = jnp.pad(x2d, ((0, M_p - M), (0, idim_p - idim)))
    if idim_p == idim and hidden_p == hidden:
        w1_p, w2_p = w1, w2
    else:
        w1_p = jnp.pad(w1, ((0, idim_p - idim), (0, hidden_p - hidden)))
        w2_p = jnp.pad(w2, ((0, hidden_p - hidden), (0, idim_p - idim)))
    w1_bf = w1_p.astype(jnp.bfloat16)
    w2_bf = w2_p.astype(jnp.bfloat16)
    b1_p = jnp.pad(b1, (0, hidden_p - hidden)).reshape(1, hidden_p).astype(jnp.float32)
    b2_p = jnp.pad(b2, (0, idim_p - idim)).reshape(1, idim_p).astype(jnp.float32)

    n_row_tiles = M_p // tm
    flops = 4 * M_p * idim_p * hidden_p                       # two matmuls
    weight_stream = 2 * idim_p * hidden_p * 2 * (1 if resident else n_row_tiles)
    bytes_accessed = (M_p * idim_p * (x_bytes + out_bytes)
                      + weight_stream + (hidden_p + idim_p) * 4)
    cost = pl.CostEstimate(flops=flops, transcendentals=0,
                           bytes_accessed=bytes_accessed)

    if resident:
        out2d = pl.pallas_call(
            _ffn_kernel_resident,
            out_shape=jax.ShapeDtypeStruct((M_p, idim_p), x.dtype),
            grid_spec=pltpu.PrefetchScalarGridSpec(
                num_scalar_prefetch=0,
                grid=(n_row_tiles,),
                in_specs=[
                    pl.BlockSpec((tm, idim_p), lambda i: (i, 0)),        # x tile
                    pl.BlockSpec((idim_p, hidden_p), lambda i: (0, 0)),  # W1 resident
                    pl.BlockSpec((1, hidden_p), lambda i: (0, 0)),       # b1
                    pl.BlockSpec((hidden_p, idim_p), lambda i: (0, 0)),  # W2 resident
                    pl.BlockSpec((1, idim_p), lambda i: (0, 0)),         # b2
                ],
                out_specs=pl.BlockSpec((tm, idim_p), lambda i: (i, 0)),
            ),
            compiler_params=pltpu.CompilerParams(
                dimension_semantics=("parallel",),
                vmem_limit_bytes=_VMEM_LIMIT),
            cost_estimate=cost,
        )(x2d, w1_bf, b1_p, w2_bf, b2_p)
    else:
        out2d = pl.pallas_call(
            _ffn_kernel_chunked,
            out_shape=jax.ShapeDtypeStruct((M_p, idim_p), x.dtype),
            grid_spec=pltpu.PrefetchScalarGridSpec(
                num_scalar_prefetch=0,
                grid=(n_row_tiles, hidden_p // th),
                in_specs=[
                    pl.BlockSpec((tm, idim_p), lambda i, k: (i, 0)),     # x tile
                    pl.BlockSpec((idim_p, th), lambda i, k: (0, k)),     # W1 chunk
                    pl.BlockSpec((1, th), lambda i, k: (0, k)),          # b1 chunk
                    pl.BlockSpec((th, idim_p), lambda i, k: (k, 0)),     # W2 chunk
                    pl.BlockSpec((1, idim_p), lambda i, k: (0, 0)),      # b2
                ],
                out_specs=pl.BlockSpec((tm, idim_p), lambda i, k: (i, 0)),
                scratch_shapes=[pltpu.VMEM((tm, idim_p), jnp.float32)],
            ),
            compiler_params=pltpu.CompilerParams(
                dimension_semantics=("parallel", "arbitrary"),
                vmem_limit_bytes=_VMEM_LIMIT),
            cost_estimate=cost,
        )(x2d, w1_bf, b1_p, w2_bf, b2_p)

    if M_p != M or idim_p != idim:
        out2d = out2d[:M, :idim]
    return out2d.reshape(batch, seq, idim)


def _ref_ffn(x, w1, b1, w2, b2):
    h = jnp.maximum(x @ w1 + b1, 0.0)
    return h @ w2 + b2


if __name__ == "__main__":
    # Small shapes consistent with the module: (batch, seq, idim), hidden_units.
    batch, seq, idim, hidden = 2, 8, 32, 64

    key = jax.random.PRNGKey(0)
    kx, kw1, kb1, kw2, kb2 = jax.random.split(key, 5)

    x = jax.random.normal(kx, (batch, seq, idim), dtype=jnp.float32)
    # nn.Linear weights stored pre-transposed as (in, out) for the kernel.
    w1 = jax.random.normal(kw1, (idim, hidden), dtype=jnp.float32) * (1.0 / idim**0.5)
    b1 = jax.random.normal(kb1, (hidden,), dtype=jnp.float32) * 0.01
    w2 = jax.random.normal(kw2, (hidden, idim), dtype=jnp.float32) * (1.0 / hidden**0.5)
    b2 = jax.random.normal(kb2, (idim,), dtype=jnp.float32) * 0.01

    out = positionwise_feed_forward(x, w1, b1, w2, b2)
    out = jax.block_until_ready(out)

    ref = _ref_ffn(x, w1, b1, w2, b2)
    assert out.shape == (batch, seq, idim)
    # bf16 MXU inputs with f32 accumulation -> compare at bf16-level tolerance.
    assert jnp.allclose(out, ref, atol=5e-2, rtol=5e-2), "mismatch vs reference"

    print("KERNEL_OK")
</pallas_src>

<mosaic_0001>
module attributes {stable_mosaic.version = 11 : i64} {
  func.func @_ffn_kernel_resident(%arg0: i32, %arg1: memref<16x128xf32, #tpu.memory_space<vmem>>, %arg2: memref<128x128xbf16, #tpu.memory_space<vmem>>, %arg3: memref<1x128xf32, #tpu.memory_space<vmem>>, %arg4: memref<128x128xbf16, #tpu.memory_space<vmem>>, %arg5: memref<1x128xf32, #tpu.memory_space<vmem>>, %arg6: memref<16x128xf32, #tpu.memory_space<vmem>>) attributes {dimension_semantics = [#tpu.dimension_semantics<parallel>], iteration_bounds = array<i64: 1>, scalar_prefetch = 0 : i64, scratch_operands = 0 : i64, tpu.core_type = #tpu.core_type<tc>, window_params = [{transform_indices = @transform_0, window_bounds = array<i64: 16, 128>}, {pipeline_mode = #tpu.pipeline_mode<synchronous>, transform_indices = @transform_1, window_bounds = array<i64: 128, 128>}, {pipeline_mode = #tpu.pipeline_mode<synchronous>, transform_indices = @transform_2, window_bounds = array<i64: 1, 128>}, {pipeline_mode = #tpu.pipeline_mode<synchronous>, transform_indices = @transform_3, window_bounds = array<i64: 128, 128>}, {pipeline_mode = #tpu.pipeline_mode<synchronous>, transform_indices = @transform_4, window_bounds = array<i64: 1, 128>}, {transform_indices = @transform_5, window_bounds = array<i64: 16, 128>}]} {
    %c0 = arith.constant 0 : index
    %c0_0 = arith.constant 0 : index
    %0 = vector.load %arg1[%c0, %c0_0] : memref<16x128xf32, #tpu.memory_space<vmem>>, vector<16x128xf32>
    %1 = arith.truncf %0 : vector<16x128xf32> to vector<16x128xbf16>
    %c0_1 = arith.constant 0 : index
    %c0_2 = arith.constant 0 : index
    %2 = vector.load %arg2[%c0_1, %c0_2] : memref<128x128xbf16, #tpu.memory_space<vmem>>, vector<128x128xbf16>
    %cst = arith.constant dense<0.000000e+00> : vector<16x128xf32>
    %3 = tpu.matmul %1, %2, %cst {dimension_numbers = #tpu.dot_dimension_numbers<[1], [0], [0], [1], [0, 0, 1, 1], [], []>} : vector<16x128xbf16>, vector<128x128xbf16>, vector<16x128xf32> -> vector<16x128xf32>
    %c0_3 = arith.constant 0 : index
    %c0_4 = arith.constant 0 : index
    %4 = vector.load %arg3[%c0_3, %c0_4] : memref<1x128xf32, #tpu.memory_space<vmem>>, vector<1x128xf32>
    %5 = vector.broadcast %4 : vector<1x128xf32> to vector<16x128xf32>
    %6 = arith.addf %3, %5 : vector<16x128xf32>
    %cst_5 = arith.constant 0.000000e+00 : f32
    %7 = vector.broadcast %cst_5 : f32 to vector<16x128xf32>
    %8 = arith.maximumf %6, %7 : vector<16x128xf32>
    %9 = arith.truncf %8 : vector<16x128xf32> to vector<16x128xbf16>
    %c0_6 = arith.constant 0 : index
    %c0_7 = arith.constant 0 : index
    %10 = vector.load %arg4[%c0_6, %c0_7] : memref<128x128xbf16, #tpu.memory_space<vmem>>, vector<128x128xbf16>
    %cst_8 = arith.constant dense<0.000000e+00> : vector<16x128xf32>
    %11 = tpu.matmul %9, %10, %cst_8 {dimension_numbers = #tpu.dot_dimension_numbers<[1], [0], [0], [1], [0, 0, 1, 1], [], []>} : vector<16x128xbf16>, vector<128x128xbf16>, vector<16x128xf32> -> vector<16x128xf32>
    %c0_9 = arith.constant 0 : index
    %c0_10 = arith.constant 0 : index
    %12 = vector.load %arg5[%c0_9, %c0_10] : memref<1x128xf32, #tpu.memory_space<vmem>>, vector<1x128xf32>
    %13 = vector.broadcast %12 : vector<1x128xf32> to vector<16x128xf32>
    %14 = arith.addf %11, %13 : vector<16x128xf32>
    %c0_11 = arith.constant 0 : index
    %c0_12 = arith.constant 0 : index
    %15 = vector.load %arg6[%c0_11, %c0_12] : memref<16x128xf32, #tpu.memory_space<vmem>>, vector<16x128xf32>
    tpu.vector_store %arg6[%c0_11, %c0_12], %14 {strides = array<i32>} : memref<16x128xf32, #tpu.memory_space<vmem>>, vector<16x128xf32>,
    return
  }
  func.func @transform_0(%arg0: i32) -> (i32, i32) {
    %c0_i32 = arith.constant 0 : i32
    %c0_i32_0 = arith.constant 0 : i32
    return %arg0, %c0_i32 : i32, i32
  }
  func.func @transform_1(%arg0: i32) -> (i32, i32) {
    %c0_i32 = arith.constant 0 : i32
    %c0_i32_0 = arith.constant 0 : i32
    %c0_i32_1 = arith.constant 0 : i32
    return %c0_i32, %c0_i32_0 : i32, i32
  }
  func.func @transform_2(%arg0: i32) -> (i32, i32) {
    %c0_i32 = arith.constant 0 : i32
    %c0_i32_0 = arith.constant 0 : i32
    %c0_i32_1 = arith.constant 0 : i32
    return %c0_i32, %c0_i32_0 : i32, i32
  }
  func.func @transform_3(%arg0: i32) -> (i32, i32) {
    %c0_i32 = arith.constant 0 : i32
    %c0_i32_0 = arith.constant 0 : i32
    %c0_i32_1 = arith.constant 0 : i32
    return %c0_i32, %c0_i32_0 : i32, i32
  }
  func.func @transform_4(%arg0: i32) -> (i32, i32) {
    %c0_i32 = arith.constant 0 : i32
    %c0_i32_0 = arith.constant 0 : i32
    %c0_i32_1 = arith.constant 0 : i32
    return %c0_i32, %c0_i32_0 : i32, i32
  }
  func.func @transform_5(%arg0: i32) -> (i32, i32) {
    %c0_i32 = arith.constant 0 : i32
    %c0_i32_0 = arith.constant 0 : i32
    return %arg0, %c0_i32 : i32, i32
  }
}

</mosaic_0001>

<llo_original>
// kernel: positionwise_feed_forward.1
$region0: #{positionwise_feed_forward.1}
  #allocation0 [shape = 'u32[]', space=smem, size = 0x4, offset = 0x4, fixed_abs, tag = 'smem constant byte address 0x4 - core index']
  #allocation1 [shape = 'u32[72,128]{1,0:T(1,128)}', space=vmem, size = 0x9000, scoped, tag = 'internal scratch']
  %s0 = inlined_call_operand.vmem [shape: f32[16,128], index: 0, kind: input, shape index: {}]
  %s1 = inlined_call_operand.vmem [shape: bf16[128,128], index: 1, kind: input, shape index: {}]
  %s2 = inlined_call_operand.vmem [shape: f32[1,128], index: 2, kind: input, shape index: {}]
  %s3 = inlined_call_operand.vmem [shape: bf16[128,128], index: 3, kind: input, shape index: {}]
  %s4 = inlined_call_operand.vmem [shape: f32[1,128], index: 4, kind: input, shape index: {}]
  %s5 = inlined_call_operand.vmem [shape: f32[16,128], index: 5, kind: output, shape index: {}]
  %s6 = sld [smem:[#allocation0]]
  $region30: #{positionwise_feed_forward.1} parent=0
    _
  %s8 = ssub.s32 1, %s6
  %s9 = scalar_select 0, %s8, %s6
  // Predicated region
  $region2: #{positionwise_feed_forward.1} parent=0 // pred_check
    _
  $region3: #{positionwise_feed_forward.1} parent=0 // pred_check_branch
    %11 = sbr.rel (0) target = $region5
  $region4: #{positionwise_feed_forward.1} parent=0 // pred_region
    _
  $region5: #{positionwise_feed_forward.1} parent=0 // pred_fallthru
    _
  // Predicated region
  $region6: #{positionwise_feed_forward.1} parent=0 // pred_check
    _
  $region7: #{positionwise_feed_forward.1} parent=0 // pred_check_branch
    %13 = sbr.rel (0) target = $region9
  $region8: #{positionwise_feed_forward.1} parent=0 // pred_region
    _
  $region9: #{positionwise_feed_forward.1} parent=0 // pred_fallthru
    _
  // Predicated region
  $region10: #{positionwise_feed_forward.1} parent=0 // pred_check
    _
  $region11: #{positionwise_feed_forward.1} parent=0 // pred_check_branch
    %15 = sbr.rel (0) target = $region13
  $region12: #{positionwise_feed_forward.1} parent=0 // pred_region
    _
  $region13: #{positionwise_feed_forward.1} parent=0 // pred_fallthru
    _
  // Predicated region
  $region14: #{positionwise_feed_forward.1} parent=0 // pred_check
    _
  $region15: #{positionwise_feed_forward.1} parent=0 // pred_check_branch
    %17 = sbr.rel (0) target = $region17
  $region16: #{positionwise_feed_forward.1} parent=0 // pred_region
    _
  $region17: #{positionwise_feed_forward.1} parent=0 // pred_fallthru
    _
  // Predicated region
  $region18: #{positionwise_feed_forward.1} parent=0 // pred_check
    _
  $region19: #{positionwise_feed_forward.1} parent=0 // pred_check_branch
    %19 = sbr.rel (0) target = $region21
  $region20: #{positionwise_feed_forward.1} parent=0 // pred_region
    _
  $region21: #{positionwise_feed_forward.1} parent=0 // pred_fallthru
    _
  %v20 = vld [vmem:[%s0] sm:$0xff]
  %v21 = vld [vmem:[%s0 + $0x8] sm:$0xff]
  %v22 = vpack.c.bf16 %v21, %v20
  %v23 = vld [vmem:[%s1] sm:$0xf]
  %v24 = vld [vmem:[%s1 + $0x4] sm:$0xf]
  %v25 = vld [vmem:[%s1 + $0x8] sm:$0xf]
  %v26 = vld [vmem:[%s1 + $0xc] sm:$0xf]
  %v27 = vld [vmem:[%s1 + $0x10] sm:$0xf]
  %v28 = vld [vmem:[%s1 + $0x14] sm:$0xf]
  %v29 = vld [vmem:[%s1 + $0x18] sm:$0xf]
  %v30 = vld [vmem:[%s1 + $0x1c] sm:$0xf]
  %v31 = vld [vmem:[%s1 + $0x20] sm:$0xf]
  %v32 = vld [vmem:[%s1 + $0x24] sm:$0xf]
  %v33 = vld [vmem:[%s1 + $0x28] sm:$0xf]
  %v34 = vld [vmem:[%s1 + $0x2c] sm:$0xf]
  %v35 = vld [vmem:[%s1 + $0x30] sm:$0xf]
  %v36 = vld [vmem:[%s1 + $0x34] sm:$0xf]
  %v37 = vld [vmem:[%s1 + $0x38] sm:$0xf]
  %v38 = vld [vmem:[%s1 + $0x3c] sm:$0xf]
  %v39 = vld [vmem:[%s2] sm:$0x1]
  %v41 = vperm.slane %v39, 0
  %v59 = vunpack.c.l.b16 %v23
  %v60 = vunpack.c.l.b16 %v24
  %v61 = vunpack.c.l.b16 %v25
  %v62 = vunpack.c.l.b16 %v26
  %v63 = vunpack.c.l.b16 %v27
  %v64 = vunpack.c.l.b16 %v28
  %v65 = vunpack.c.l.b16 %v29
  %v66 = vunpack.c.l.b16 %v30
  %v67 = vunpack.c.l.b16 %v31
  %v68 = vunpack.c.l.b16 %v32
  %v69 = vunpack.c.l.b16 %v33
  %v70 = vunpack.c.l.b16 %v34
  %v71 = vunpack.c.l.b16 %v35
  %v72 = vunpack.c.l.b16 %v36
  %v73 = vunpack.c.l.b16 %v37
  %v74 = vunpack.c.l.b16 %v38
  %v75 = vpack.c.b16 %v60, %v59
  %v76 = vpack.c.b16 %v62, %v61
  %v77 = vpack.c.b16 %v64, %v63
  %v78 = vpack.c.b16 %v66, %v65
  %v79 = vpack.c.b16 %v68, %v67
  %v80 = vpack.c.b16 %v70, %v69
  %v81 = vpack.c.b16 %v72, %v71
  %v82 = vpack.c.b16 %v74, %v73
  %91 = vmatpush.bf16.msra.mxu0 %v82
  %92 = vmatpush.bf16.msra.mxu0 %v81
  %93 = vmatpush.bf16.msra.mxu0 %v80
  %94 = vmatpush.bf16.msra.mxu0 %v79
  %95 = vmatpush.bf16.msra.mxu0 %v78
  %96 = vmatpush.bf16.msra.mxu0 %v77
  %97 = vmatpush.bf16.msra.mxu0 %v76
  %98 = vmatpush.bf16.msra.mxu0 %v75
  %99 = vmatmul.bf16.gmra.mxu0 %v22
  %v100 = vpop.f32.mrf.mxu0
  %v101 = vadd.f32 %v41, %v100
  %v102 = vpop.f32.mrf.mxu0
  %v103 = vadd.f32 %v41, %v102
  %104 = vdwg.mxu0
  %v105 = vmax.f32 %v101, 0.0
  %v106 = vmax.f32 %v103, 0.0
  %v107 = vpack.c.bf16 %v106, %v105
  %v108 = vld [vmem:[%s3] sm:$0xf]
  %v109 = vld [vmem:[%s3 + $0x4] sm:$0xf]
  %v110 = vld [vmem:[%s3 + $0x8] sm:$0xf]
  %v111 = vld [vmem:[%s3 + $0xc] sm:$0xf]
  %v112 = vld [vmem:[%s3 + $0x10] sm:$0xf]
  %v113 = vld [vmem:[%s3 + $0x14] sm:$0xf]
  %v114 = vld [vmem:[%s3 + $0x18] sm:$0xf]
  %v115 = vld [vmem:[%s3 + $0x1c] sm:$0xf]
  %v116 = vld [vmem:[%s3 + $0x20] sm:$0xf]
  %v117 = vld [vmem:[%s3 + $0x24] sm:$0xf]
  %v118 = vld [vmem:[%s3 + $0x28] sm:$0xf]
  %v119 = vld [vmem:[%s3 + $0x2c] sm:$0xf]
  %v120 = vld [vmem:[%s3 + $0x30] sm:$0xf]
  %v121 = vld [vmem:[%s3 + $0x34] sm:$0xf]
  %v122 = vld [vmem:[%s3 + $0x38] sm:$0xf]
  %v123 = vld [vmem:[%s3 + $0x3c] sm:$0xf]
  %v124 = vld [vmem:[%s4] sm:$0x1]
  %v126 = vperm.slane %v124, 0
  %v144 = vunpack.c.l.b16 %v108
  %v145 = vunpack.c.l.b16 %v109
  %v146 = vunpack.c.l.b16 %v110
  %v147 = vunpack.c.l.b16 %v111
  %v148 = vunpack.c.l.b16 %v112
  %v149 = vunpack.c.l.b16 %v113
  %v150 = vunpack.c.l.b16 %v114
  %v151 = vunpack.c.l.b16 %v115
  %v152 = vunpack.c.l.b16 %v116
  %v153 = vunpack.c.l.b16 %v117
  %v154 = vunpack.c.l.b16 %v118
  %v155 = vunpack.c.l.b16 %v119
  %v156 = vunpack.c.l.b16 %v120
  %v157 = vunpack.c.l.b16 %v121
  %v158 = vunpack.c.l.b16 %v122
  %v159 = vunpack.c.l.b16 %v123
  %v160 = vpack.c.b16 %v145, %v144
  %v161 = vpack.c.b16 %v147, %v146
  %v162 = vpack.c.b16 %v149, %v148
  %v163 = vpack.c.b16 %v151, %v150
  %v164 = vpack.c.b16 %v153, %v152
  %v165 = vpack.c.b16 %v155, %v154
  %v166 = vpack.c.b16 %v157, %v156
  %v167 = vpack.c.b16 %v159, %v158
  %176 = vmatpush.bf16.msra.mxu0 %v167
  %177 = vmatpush.bf16.msra.mxu0 %v166
  %178 = vmatpush.bf16.msra.mxu0 %v165
  %179 = vmatpush.bf16.msra.mxu0 %v164
  %180 = vmatpush.bf16.msra.mxu0 %v163
  %181 = vmatpush.bf16.msra.mxu0 %v162
  %182 = vmatpush.bf16.msra.mxu0 %v161
  %183 = vmatpush.bf16.msra.mxu0 %v160
  %184 = vmatmul.bf16.gmra.mxu0 %v107
  %v185 = vpop.f32.mrf.mxu0
  %v186 = vadd.f32 %v126, %v185
  %v187 = vpop.f32.mrf.mxu0
  %v188 = vadd.f32 %v126, %v187
  %189 = vdwg.mxu0
  %190 = vst [vmem:[%s5] sm:$0xff] %v186
  %191 = vst [vmem:[%s5 + $0x8] sm:$0xff] %v188
  // Predicated region
  $region22: #{positionwise_feed_forward.1} parent=0 // pred_check
    _
  $region23: #{positionwise_feed_forward.1} parent=0 // pred_check_branch
    %193 = sbr.rel (0) target = $region25
  $region24: #{positionwise_feed_forward.1} parent=0 // pred_region
    _
  $region25: #{positionwise_feed_forward.1} parent=0 // pred_fallthru
    _
  // Predicated region
  $region26: #{positionwise_feed_forward.1} parent=0 // pred_check
    _
  $region27: #{positionwise_feed_forward.1} parent=0 // pred_check_branch
    %195 = sbr.rel (0) target = $region29
  $region28: #{positionwise_feed_forward.1} parent=0 // pred_region
    _
  $region29: #{positionwise_feed_forward.1} parent=0 // pred_fallthru
    _

</llo_original>
